<compile_context>
chip_gen: v7x
topology: tpu7x:2x2x1
jax: 0.10.0
libtpu: 0.0.40
codegen_flags: <defaults>
</compile_context>

<pallas_src>
import jax
import jax.numpy as jnp
from jax.experimental import pallas as pl
from jax.experimental.pallas import tpu as pltpu


_F_CHUNK = 512            # lanes of F per partial-sum step
_ROW_TILE_QUANTUM = 1024  # rows; keeps the (tb//128, 128) out block (8,128)-aligned


def _linear_kernel(x_ref, w_ref, b_ref, o_ref):
    # x_ref: (tb, F) VMEM tile, w_ref: (1, F) VMEM (resident across tiles),
    # b_ref: (1, 1) SMEM scalar, o_ref: (tb // 128, 128) lane-dense VMEM tile.
    _, F = x_ref.shape
    acc = None
    # Strip-mine F into <=512-lane chunks: bulk of the work stays on the VPU,
    # one cross-lane reduce per chunk, short live vector ranges.
    for start in range(0, F, _F_CHUNK):
        size = min(_F_CHUNK, F - start)
        xc = x_ref[:, start:start + size].astype(jnp.float32)
        wc = w_ref[:, start:start + size].astype(jnp.float32)
        part = jnp.sum(xc * wc, axis=-1)          # (tb,) f32 partial dot product
        acc = part if acc is None else acc + part
    acc = acc + b_ref[0, 0]
    # Lane-dense store: (tb,) -> (tb//128, 128), row-major order preserved.
    o_ref[...] = acc.reshape(o_ref.shape).astype(o_ref.dtype)


def _vmem_budget():
    """Return (per-x-buffer bytes, scoped vmem limit bytes), generation-aware."""
    try:
        kind = jax.devices()[0].device_kind.lower()
    except Exception:
        kind = ""
    if "v7" in kind:
        # 64 MiB VMEM per TC, 2 TCs each holding their own double-buffered tile.
        return 8 * 1024 * 1024, 40 * 1024 * 1024
    if "v6" in kind:
        # 128 MiB VMEM, ~1.4 TB/s HBM: fat tiles pay off the most here.
        return 24 * 1024 * 1024, 96 * 1024 * 1024
    if "v5" in kind:
        # 128 MiB physical VMEM, but explicitly raise the 16 MiB scoped default.
        return 12 * 1024 * 1024, 64 * 1024 * 1024
    return 8 * 1024 * 1024, 40 * 1024 * 1024      # conservative fallback


def linear_regression_forward(x, weight, bias):
    """x: (B, F), weight: (1, F), bias: (1,) -> (B, 1) = x @ W.T + b."""
    B, F = x.shape
    dtype = x.dtype
    itemsize = jnp.dtype(dtype).itemsize

    per_buf_bytes, vmem_limit = _vmem_budget()

    # Rows per tile: as many as fit the per-buffer byte budget, in 1024-row quanta.
    rows_budget = max(
        _ROW_TILE_QUANTUM,
        (per_buf_bytes // max(1, F * itemsize)) // _ROW_TILE_QUANTUM * _ROW_TILE_QUANTUM,
    )

    if B >= _ROW_TILE_QUANTUM:
        # Large batch: no host-side pad; Pallas handles the ragged last block
        # (OOB reads are garbage; those rows are sliced off below).
        tb = min(rows_budget, (B // _ROW_TILE_QUANTUM) * _ROW_TILE_QUANTUM)
        x_in = x
    else:
        # Tiny batch: pad up to one minimum tile (negligible copy).
        tb = _ROW_TILE_QUANTUM
        x_in = jnp.pad(x, ((0, tb - B), (0, 0)))

    num_tiles = pl.cdiv(max(B, tb), tb)
    rows_per_tile = tb // 128

    # Ensure the double-buffered x tile plus f32 temporaries fits scoped VMEM.
    tile_bytes = tb * F * itemsize
    vmem_limit = max(vmem_limit, 3 * tile_bytes + (1 << 20))
    # TODO(synk): for F so large that a single 1024-row tile overflows physical
    # VMEM, an F-chunked grid axis with a resident accumulator would be needed.

    b2d = bias.reshape(1, 1).astype(jnp.float32)

    out = pl.pallas_call(
        _linear_kernel,
        out_shape=jax.ShapeDtypeStruct((num_tiles * rows_per_tile, 128), dtype),
        grid_spec=pltpu.PrefetchScalarGridSpec(
            num_scalar_prefetch=0,
            grid=(num_tiles,),
            in_specs=[
                # Streamed, double-buffered x tiles.
                pl.BlockSpec((tb, F), lambda i: (i, 0)),
                # Weight stays resident in VMEM across all tiles.
                pl.BlockSpec((1, F), lambda i: (0, 0)),
                # Bias scalar in SMEM (no per-tile VMEM block / broadcast DMA).
                pl.BlockSpec(memory_space=pltpu.MemorySpace.SMEM),
            ],
            # Lane-dense output blocks: unmasked full-vreg stores.
            out_specs=pl.BlockSpec((rows_per_tile, 128), lambda i: (i, 0)),
        ),
        compiler_params=pltpu.CompilerParams(
            dimension_semantics=("parallel",),
            vmem_limit_bytes=int(vmem_limit),
        ),
    )(x_in, weight, b2d)

    # Undo the lane-dense tiling; drop ragged/padded rows.
    return out.reshape(-1)[:B].reshape(B, 1)


if __name__ == "__main__":
    key = jax.random.PRNGKey(0)
    kx, kw, kb = jax.random.split(key, 3)

    batch, in_features = 8, 32

    # Deterministic example inputs; shapes from nn.Linear(in_features, 1).
    x = jax.random.normal(kx, (batch, in_features), dtype=jnp.float32)
    bound = 1.0 / (in_features ** 0.5)  # mimic PyTorch default uniform init range
    weight = jax.random.uniform(kw, (1, in_features), minval=-bound, maxval=bound,
                                dtype=jnp.float32)
    bias = jax.random.uniform(kb, (1,), minval=-bound, maxval=bound,
                              dtype=jnp.float32)

    out = linear_regression_forward(x, weight, bias)
    out = jax.block_until_ready(out)

    # Cross-check against plain JAX reference.
    ref = x @ weight.T + bias
    assert out.shape == (batch, 1)
    assert jnp.allclose(out, ref, atol=1e-5, rtol=1e-5)

    print("KERNEL_OK")
</pallas_src>

<mosaic_0001>
module attributes {stable_mosaic.version = 11 : i64} {
  func.func @_linear_kernel(%arg0: i32, %arg1: memref<1024x32xf32, #tpu.memory_space<vmem>>, %arg2: memref<1x32xf32, #tpu.memory_space<vmem>>, %arg3: memref<1x1xf32, #tpu.memory_space<smem>>, %arg4: memref<8x128xf32, #tpu.memory_space<vmem>>) attributes {dimension_semantics = [#tpu.dimension_semantics<parallel>], iteration_bounds = array<i64: 1>, scalar_prefetch = 0 : i64, scratch_operands = 0 : i64, tpu.core_type = #tpu.core_type<tc>, window_params = [{transform_indices = @transform_0, window_bounds = array<i64: 1024, 32>}, {pipeline_mode = #tpu.pipeline_mode<synchronous>, transform_indices = @transform_1, window_bounds = array<i64: 1, 32>}, {transform_indices = @transform_2, window_bounds = array<i64: 1, 1>}, {transform_indices = @transform_3, window_bounds = array<i64: 8, 128>}]} {
    %c0 = arith.constant 0 : index
    %c0_0 = arith.constant 0 : index
    %0 = vector.load %arg1[%c0, %c0_0] : memref<1024x32xf32, #tpu.memory_space<vmem>>, vector<1024x32xf32>
    %c0_1 = arith.constant 0 : index
    %c0_2 = arith.constant 0 : index
    %1 = vector.load %arg2[%c0_1, %c0_2] : memref<1x32xf32, #tpu.memory_space<vmem>>, vector<1x32xf32>
    %2 = vector.broadcast %1 : vector<1x32xf32> to vector<1024x32xf32>
    %3 = arith.mulf %0, %2 : vector<1024x32xf32>
    %cst = arith.constant dense<0.000000e+00> : vector<1024xf32>
    %4 = vector.multi_reduction <add>, %3, %cst [1] : vector<1024x32xf32> to vector<1024xf32>
    %c0_3 = arith.constant 0 : index
    %c0_4 = arith.constant 0 : index
    %5 = memref.load %arg3[%c0_3, %c0_4] : memref<1x1xf32, #tpu.memory_space<smem>>
    %6 = vector.broadcast %5 : f32 to vector<1024xf32>
    %7 = arith.addf %4, %6 : vector<1024xf32>
    %8 = vector.shape_cast %7 : vector<1024xf32> to vector<8x128xf32>
    %c0_5 = arith.constant 0 : index
    %c0_6 = arith.constant 0 : index
    %9 = vector.load %arg4[%c0_5, %c0_6] : memref<8x128xf32, #tpu.memory_space<vmem>>, vector<8x128xf32>
    tpu.vector_store %arg4[%c0_5, %c0_6], %8 {strides = array<i32>} : memref<8x128xf32, #tpu.memory_space<vmem>>, vector<8x128xf32>,
    return
  }
  func.func @transform_0(%arg0: i32) -> (i32, i32) {
    %c0_i32 = arith.constant 0 : i32
    %c0_i32_0 = arith.constant 0 : i32
    return %arg0, %c0_i32 : i32, i32
  }
  func.func @transform_1(%arg0: i32) -> (i32, i32) {
    %c0_i32 = arith.constant 0 : i32
    %c0_i32_0 = arith.constant 0 : i32
    %c0_i32_1 = arith.constant 0 : i32
    return %c0_i32, %c0_i32_0 : i32, i32
  }
  func.func @transform_2(%arg0: i32) -> (i32, i32) {
    %c0_i32 = arith.constant 0 : i32
    %c0_i32_0 = arith.constant 0 : i32
    %c0_i32_1 = arith.constant 0 : i32
    return %c0_i32, %c0_i32_0 : i32, i32
  }
  func.func @transform_3(%arg0: i32) -> (i32, i32) {
    %c0_i32 = arith.constant 0 : i32
    %c0_i32_0 = arith.constant 0 : i32
    return %arg0, %c0_i32 : i32, i32
  }
}

</mosaic_0001>

<llo_original>
// kernel: tpu_custom_call.1
$region0: #{tpu_custom_call.1}
  #allocation0 [shape = 'u32[]', space=smem, size = 0x4, offset = 0x4, fixed_abs, tag = 'smem constant byte address 0x4 - core index']
  #allocation1 [shape = 'u32[144,128]{1,0:T(1,128)}', space=vmem, size = 0x12000, scoped, tag = 'internal scratch']
  #allocation2 [shape = 'f32[1,1]{1,0:T(1,128)S(6)}', space=smem, size = 0x200, scoped, tag = 'scoped memory for tpu_custom_call.1']
  %s0 = inlined_call_operand.vmem [shape: f32[1024,32], index: 0, kind: input, shape index: {}]
  %s1 = inlined_call_operand.vmem [shape: f32[1,32], index: 1, kind: input, shape index: {}]
  %s2 = inlined_call_operand.<no memory space> [shape: f32[1,1], index: 2, kind: input, shape index: {}]
  %s3 = inlined_call_operand.hbm [shape: f32[8,128], index: 3, kind: output, shape index: {}]
  %s4 = sld [smem:[#allocation0]]
  $region22: #{tpu_custom_call.1} parent=0
    _
  %s6 = ssub.s32 1, %s4
  %s7 = scalar_select 0, %s6, %s4
  %8 = sst [smem:[#allocation2]] %s2
  $region1: #{tpu_custom_call.1} parent=0
    #allocation3 [shape = 'u8[4096]{0}', space=vmem, size = 0x1000, scoped, tag = 'output window, operand 0, single buffered']
    #allocation4 [shape = 's32[1]{0}', space=sflag, size = 0x4, scoped, tag = 'scoped memory for tpu_custom_call.1']
    %9 = vsyncpa [#allocation4], 0
    // Predicated region
    $region2: #{tpu_custom_call.1} parent=1 // pred_check
      _
    $region3: #{tpu_custom_call.1} parent=1 // pred_check_branch
      %11 = sbr.rel (0) target = $region5
    $region4: #{tpu_custom_call.1} parent=1 // pred_region
      _
    $region5: #{tpu_custom_call.1} parent=1 // pred_fallthru
      _
    // Predicated region
    $region6: #{tpu_custom_call.1} parent=1 // pred_check
      _
    $region7: #{tpu_custom_call.1} parent=1 // pred_check_branch
      %13 = sbr.rel (0) target = $region9
    $region8: #{tpu_custom_call.1} parent=1 // pred_region
      _
    $region9: #{tpu_custom_call.1} parent=1 // pred_fallthru
      _
    // Predicated region
    $region10: #{tpu_custom_call.1} parent=1 // pred_check
      _
    $region11: #{tpu_custom_call.1} parent=1 // pred_check_branch
      %15 = sbr.rel (0) target = $region13
    $region12: #{tpu_custom_call.1} parent=1 // pred_region
      _
    $region13: #{tpu_custom_call.1} parent=1 // pred_fallthru
      _
    %v16 = vld [vmem:[%s0] sm:$0xff]
    %v17 = vld [vmem:[%s0 + $0x8] sm:$0xff]
    %v18 = vld [vmem:[%s0 + $0x10] sm:$0xff]
    %v19 = vld [vmem:[%s0 + $0x18] sm:$0xff]
    %v20 = vld [vmem:[%s0 + $0x20] sm:$0xff]
    %v21 = vld [vmem:[%s0 + $0x28] sm:$0xff]
    %v22 = vld [vmem:[%s0 + $0x30] sm:$0xff]
    %v23 = vld [vmem:[%s0 + $0x38] sm:$0xff]
    %v24 = vld [vmem:[%s0 + $0x40] sm:$0xff]
    %v25 = vld [vmem:[%s0 + $0x48] sm:$0xff]
    %v26 = vld [vmem:[%s0 + $0x50] sm:$0xff]
    %v27 = vld [vmem:[%s0 + $0x58] sm:$0xff]
    %v28 = vld [vmem:[%s0 + $0x60] sm:$0xff]
    %v29 = vld [vmem:[%s0 + $0x68] sm:$0xff]
    %v30 = vld [vmem:[%s0 + $0x70] sm:$0xff]
    %v31 = vld [vmem:[%s0 + $0x78] sm:$0xff]
    %v32 = vld [vmem:[%s0 + $0x80] sm:$0xff]
    %v33 = vld [vmem:[%s0 + $0x88] sm:$0xff]
    %v34 = vld [vmem:[%s0 + $0x90] sm:$0xff]
    %v35 = vld [vmem:[%s0 + $0x98] sm:$0xff]
    %v36 = vld [vmem:[%s0 + $0xa0] sm:$0xff]
    %v37 = vld [vmem:[%s0 + $0xa8] sm:$0xff]
    %v38 = vld [vmem:[%s0 + $0xb0] sm:$0xff]
    %v39 = vld [vmem:[%s0 + $0xb8] sm:$0xff]
    %v40 = vld [vmem:[%s0 + $0xc0] sm:$0xff]
    %v41 = vld [vmem:[%s0 + $0xc8] sm:$0xff]
    %v42 = vld [vmem:[%s0 + $0xd0] sm:$0xff]
    %v43 = vld [vmem:[%s0 + $0xd8] sm:$0xff]
    %v44 = vld [vmem:[%s0 + $0xe0] sm:$0xff]
    %v45 = vld [vmem:[%s0 + $0xe8] sm:$0xff]
    %v46 = vld [vmem:[%s0 + $0xf0] sm:$0xff]
    %v47 = vld [vmem:[%s0 + $0xf8] sm:$0xff]
    %v48 = vld [vmem:[%s0 + $0x100] sm:$0xff]
    %v49 = vld [vmem:[%s0 + $0x108] sm:$0xff]
    %v50 = vld [vmem:[%s0 + $0x110] sm:$0xff]
    %v51 = vld [vmem:[%s0 + $0x118] sm:$0xff]
    %v52 = vld [vmem:[%s0 + $0x120] sm:$0xff]
    %v53 = vld [vmem:[%s0 + $0x128] sm:$0xff]
    %v54 = vld [vmem:[%s0 + $0x130] sm:$0xff]
    %v55 = vld [vmem:[%s0 + $0x138] sm:$0xff]
    %v56 = vld [vmem:[%s0 + $0x140] sm:$0xff]
    %v57 = vld [vmem:[%s0 + $0x148] sm:$0xff]
    %v58 = vld [vmem:[%s0 + $0x150] sm:$0xff]
    %v59 = vld [vmem:[%s0 + $0x158] sm:$0xff]
    %v60 = vld [vmem:[%s0 + $0x160] sm:$0xff]
    %v61 = vld [vmem:[%s0 + $0x168] sm:$0xff]
    %v62 = vld [vmem:[%s0 + $0x170] sm:$0xff]
    %v63 = vld [vmem:[%s0 + $0x178] sm:$0xff]
    %v64 = vld [vmem:[%s0 + $0x180] sm:$0xff]
    %v65 = vld [vmem:[%s0 + $0x188] sm:$0xff]
    %v66 = vld [vmem:[%s0 + $0x190] sm:$0xff]
    %v67 = vld [vmem:[%s0 + $0x198] sm:$0xff]
    %v68 = vld [vmem:[%s0 + $0x1a0] sm:$0xff]
    %v69 = vld [vmem:[%s0 + $0x1a8] sm:$0xff]
    %v70 = vld [vmem:[%s0 + $0x1b0] sm:$0xff]
    %v71 = vld [vmem:[%s0 + $0x1b8] sm:$0xff]
    %v72 = vld [vmem:[%s0 + $0x1c0] sm:$0xff]
    %v73 = vld [vmem:[%s0 + $0x1c8] sm:$0xff]
    %v74 = vld [vmem:[%s0 + $0x1d0] sm:$0xff]
    %v75 = vld [vmem:[%s0 + $0x1d8] sm:$0xff]
    %v76 = vld [vmem:[%s0 + $0x1e0] sm:$0xff]
    %v77 = vld [vmem:[%s0 + $0x1e8] sm:$0xff]
    %v78 = vld [vmem:[%s0 + $0x1f0] sm:$0xff]
    %v79 = vld [vmem:[%s0 + $0x1f8] sm:$0xff]
    %v80 = vld [vmem:[%s0 + $0x200] sm:$0xff]
    %v81 = vld [vmem:[%s0 + $0x208] sm:$0xff]
    %v82 = vld [vmem:[%s0 + $0x210] sm:$0xff]
    %v83 = vld [vmem:[%s0 + $0x218] sm:$0xff]
    %v84 = vld [vmem:[%s0 + $0x220] sm:$0xff]
    %v85 = vld [vmem:[%s0 + $0x228] sm:$0xff]
    %v86 = vld [vmem:[%s0 + $0x230] sm:$0xff]
    %v87 = vld [vmem:[%s0 + $0x238] sm:$0xff]
    %v88 = vld [vmem:[%s0 + $0x240] sm:$0xff]
    %v89 = vld [vmem:[%s0 + $0x248] sm:$0xff]
    %v90 = vld [vmem:[%s0 + $0x250] sm:$0xff]
    %v91 = vld [vmem:[%s0 + $0x258] sm:$0xff]
    %v92 = vld [vmem:[%s0 + $0x260] sm:$0xff]
    %v93 = vld [vmem:[%s0 + $0x268] sm:$0xff]
    %v94 = vld [vmem:[%s0 + $0x270] sm:$0xff]
    %v95 = vld [vmem:[%s0 + $0x278] sm:$0xff]
    %v96 = vld [vmem:[%s0 + $0x280] sm:$0xff]
    %v97 = vld [vmem:[%s0 + $0x288] sm:$0xff]
    %v98 = vld [vmem:[%s0 + $0x290] sm:$0xff]
    %v99 = vld [vmem:[%s0 + $0x298] sm:$0xff]
    %v100 = vld [vmem:[%s0 + $0x2a0] sm:$0xff]
    %v101 = vld [vmem:[%s0 + $0x2a8] sm:$0xff]
    %v102 = vld [vmem:[%s0 + $0x2b0] sm:$0xff]
    %v103 = vld [vmem:[%s0 + $0x2b8] sm:$0xff]
    %v104 = vld [vmem:[%s0 + $0x2c0] sm:$0xff]
    %v105 = vld [vmem:[%s0 + $0x2c8] sm:$0xff]
    %v106 = vld [vmem:[%s0 + $0x2d0] sm:$0xff]
    %v107 = vld [vmem:[%s0 + $0x2d8] sm:$0xff]
    %v108 = vld [vmem:[%s0 + $0x2e0] sm:$0xff]
    %v109 = vld [vmem:[%s0 + $0x2e8] sm:$0xff]
    %v110 = vld [vmem:[%s0 + $0x2f0] sm:$0xff]
    %v111 = vld [vmem:[%s0 + $0x2f8] sm:$0xff]
    %v112 = vld [vmem:[%s0 + $0x300] sm:$0xff]
    %v113 = vld [vmem:[%s0 + $0x308] sm:$0xff]
    %v114 = vld [vmem:[%s0 + $0x310] sm:$0xff]
    %v115 = vld [vmem:[%s0 + $0x318] sm:$0xff]
    %v116 = vld [vmem:[%s0 + $0x320] sm:$0xff]
    %v117 = vld [vmem:[%s0 + $0x328] sm:$0xff]
    %v118 = vld [vmem:[%s0 + $0x330] sm:$0xff]
    %v119 = vld [vmem:[%s0 + $0x338] sm:$0xff]
    %v120 = vld [vmem:[%s0 + $0x340] sm:$0xff]
    %v121 = vld [vmem:[%s0 + $0x348] sm:$0xff]
    %v122 = vld [vmem:[%s0 + $0x350] sm:$0xff]
    %v123 = vld [vmem:[%s0 + $0x358] sm:$0xff]
    %v124 = vld [vmem:[%s0 + $0x360] sm:$0xff]
    %v125 = vld [vmem:[%s0 + $0x368] sm:$0xff]
    %v126 = vld [vmem:[%s0 + $0x370] sm:$0xff]
    %v127 = vld [vmem:[%s0 + $0x378] sm:$0xff]
    %v128 = vld [vmem:[%s0 + $0x380] sm:$0xff]
    %v129 = vld [vmem:[%s0 + $0x388] sm:$0xff]
    %v130 = vld [vmem:[%s0 + $0x390] sm:$0xff]
    %v131 = vld [vmem:[%s0 + $0x398] sm:$0xff]
    %v132 = vld [vmem:[%s0 + $0x3a0] sm:$0xff]
    %v133 = vld [vmem:[%s0 + $0x3a8] sm:$0xff]
    %v134 = vld [vmem:[%s0 + $0x3b0] sm:$0xff]
    %v135 = vld [vmem:[%s0 + $0x3b8] sm:$0xff]
    %v136 = vld [vmem:[%s0 + $0x3c0] sm:$0xff]
    %v137 = vld [vmem:[%s0 + $0x3c8] sm:$0xff]
    %v138 = vld [vmem:[%s0 + $0x3d0] sm:$0xff]
    %v139 = vld [vmem:[%s0 + $0x3d8] sm:$0xff]
    %v140 = vld [vmem:[%s0 + $0x3e0] sm:$0xff]
    %v141 = vld [vmem:[%s0 + $0x3e8] sm:$0xff]
    %v142 = vld [vmem:[%s0 + $0x3f0] sm:$0xff]
    %v143 = vld [vmem:[%s0 + $0x3f8] sm:$0xff]
    %v144 = vld [vmem:[%s1] sm:$0x1]
    %v146 = vlaneseq
    %v147 = vshrl.u32 %v146, 7
    %v148 = vsub.s32 0, %v147
    %v149 = vrot.slane %v144, %v148
    %v151 = vmul.f32 %v16, %v149
    %v152 = vmul.f32 %v17, %v149
    %v153 = vmul.f32 %v18, %v149
    %v154 = vmul.f32 %v19, %v149
    %v155 = vmul.f32 %v20, %v149
    %v156 = vmul.f32 %v21, %v149
    %v157 = vmul.f32 %v22, %v149
    %v158 = vmul.f32 %v23, %v149
    %v159 = vmul.f32 %v24, %v149
    %v160 = vmul.f32 %v25, %v149
    %v161 = vmul.f32 %v26, %v149
    %v162 = vmul.f32 %v27, %v149
    %v163 = vmul.f32 %v28, %v149
    %v164 = vmul.f32 %v29, %v149
    %v165 = vmul.f32 %v30, %v149
    %v166 = vmul.f32 %v31, %v149
    %v167 = vmul.f32 %v32, %v149
    %v168 = vmul.f32 %v33, %v149
    %v169 = vmul.f32 %v34, %v149
    %v170 = vmul.f32 %v35, %v149
    %v171 = vmul.f32 %v36, %v149
    %v172 = vmul.f32 %v37, %v149
    %v173 = vmul.f32 %v38, %v149
    %v174 = vmul.f32 %v39, %v149
    %v175 = vmul.f32 %v40, %v149
    %v176 = vmul.f32 %v41, %v149
    %v177 = vmul.f32 %v42, %v149
    %v178 = vmul.f32 %v43, %v149
    %v179 = vmul.f32 %v44, %v149
    %v180 = vmul.f32 %v45, %v149
    %v181 = vmul.f32 %v46, %v149
    %v182 = vmul.f32 %v47, %v149
    %v183 = vmul.f32 %v48, %v149
    %v184 = vmul.f32 %v49, %v149
    %v185 = vmul.f32 %v50, %v149
    %v186 = vmul.f32 %v51, %v149
    %v187 = vmul.f32 %v52, %v149
    %v188 = vmul.f32 %v53, %v149
    %v189 = vmul.f32 %v54, %v149
    %v190 = vmul.f32 %v55, %v149
    %v191 = vmul.f32 %v56, %v149
    %v192 = vmul.f32 %v57, %v149
    %v193 = vmul.f32 %v58, %v149
    %v194 = vmul.f32 %v59, %v149
    %v195 = vmul.f32 %v60, %v149
    %v196 = vmul.f32 %v61, %v149
    %v197 = vmul.f32 %v62, %v149
    %v198 = vmul.f32 %v63, %v149
    %v199 = vmul.f32 %v64, %v149
    %v200 = vmul.f32 %v65, %v149
    %v201 = vmul.f32 %v66, %v149
    %v202 = vmul.f32 %v67, %v149
    %v203 = vmul.f32 %v68, %v149
    %v204 = vmul.f32 %v69, %v149
    %v205 = vmul.f32 %v70, %v149
    %v206 = vmul.f32 %v71, %v149
    %v207 = vmul.f32 %v72, %v149
    %v208 = vmul.f32 %v73, %v149
    %v209 = vmul.f32 %v74, %v149
    %v210 = vmul.f32 %v75, %v149
    %v211 = vmul.f32 %v76, %v149
    %v212 = vmul.f32 %v77, %v149
    %v213 = vmul.f32 %v78, %v149
    %v214 = vmul.f32 %v79, %v149
    %v215 = vmul.f32 %v80, %v149
    %v216 = vmul.f32 %v81, %v149
    %v217 = vmul.f32 %v82, %v149
    %v218 = vmul.f32 %v83, %v149
    %v219 = vmul.f32 %v84, %v149
    %v220 = vmul.f32 %v85, %v149
    %v221 = vmul.f32 %v86, %v149
    %v222 = vmul.f32 %v87, %v149
    %v223 = vmul.f32 %v88, %v149
    %v224 = vmul.f32 %v89, %v149
    %v225 = vmul.f32 %v90, %v149
    %v226 = vmul.f32 %v91, %v149
    %v227 = vmul.f32 %v92, %v149
    %v228 = vmul.f32 %v93, %v149
    %v229 = vmul.f32 %v94, %v149
    %v230 = vmul.f32 %v95, %v149
    %v231 = vmul.f32 %v96, %v149
    %v232 = vmul.f32 %v97, %v149
    %v233 = vmul.f32 %v98, %v149
    %v234 = vmul.f32 %v99, %v149
    %v235 = vmul.f32 %v100, %v149
    %v236 = vmul.f32 %v101, %v149
    %v237 = vmul.f32 %v102, %v149
    %v238 = vmul.f32 %v103, %v149
    %v239 = vmul.f32 %v104, %v149
    %v240 = vmul.f32 %v105, %v149
    %v241 = vmul.f32 %v106, %v149
    %v242 = vmul.f32 %v107, %v149
    %v243 = vmul.f32 %v108, %v149
    %v244 = vmul.f32 %v109, %v149
    %v245 = vmul.f32 %v110, %v149
    %v246 = vmul.f32 %v111, %v149
    %v247 = vmul.f32 %v112, %v149
    %v248 = vmul.f32 %v113, %v149
    %v249 = vmul.f32 %v114, %v149
    %v250 = vmul.f32 %v115, %v149
    %v251 = vmul.f32 %v116, %v149
    %v252 = vmul.f32 %v117, %v149
    %v253 = vmul.f32 %v118, %v149
    %v254 = vmul.f32 %v119, %v149
    %v255 = vmul.f32 %v120, %v149
    %v256 = vmul.f32 %v121, %v149
    %v257 = vmul.f32 %v122, %v149
    %v258 = vmul.f32 %v123, %v149
    %v259 = vmul.f32 %v124, %v149
    %v260 = vmul.f32 %v125, %v149
    %v261 = vmul.f32 %v126, %v149
    %v262 = vmul.f32 %v127, %v149
    %v263 = vmul.f32 %v128, %v149
    %v264 = vmul.f32 %v129, %v149
    %v265 = vmul.f32 %v130, %v149
    %v266 = vmul.f32 %v131, %v149
    %v267 = vmul.f32 %v132, %v149
    %v268 = vmul.f32 %v133, %v149
    %v269 = vmul.f32 %v134, %v149
    %v270 = vmul.f32 %v135, %v149
    %v271 = vmul.f32 %v136, %v149
    %v272 = vmul.f32 %v137, %v149
    %v273 = vmul.f32 %v138, %v149
    %v274 = vmul.f32 %v139, %v149
    %v275 = vmul.f32 %v140, %v149
    %v276 = vmul.f32 %v141, %v149
    %v277 = vmul.f32 %v142, %v149
    %v278 = vmul.f32 %v143, %v149
    %vm279 = vcmask 261120
    %v280 = vsel %vm279, %v151, 0.0
    %281 = vadd.xlane.f32.xlu0 %v280
    %v282 = vpop.xlane.xlu0 %281
    %v283 = vsel %vm279, %v152, 0.0
    %284 = vadd.xlane.f32.xlu0 %v283
    %v285 = vpop.xlane.xlu0 %284
    %v286 = vsel %vm279, %v153, 0.0
    %287 = vadd.xlane.f32.xlu0 %v286
    %v288 = vpop.xlane.xlu0 %287
    %v289 = vsel %vm279, %v154, 0.0
    %290 = vadd.xlane.f32.xlu0 %v289
    %v291 = vpop.xlane.xlu0 %290
    %v292 = vsel %vm279, %v155, 0.0
    %293 = vadd.xlane.f32.xlu0 %v292
    %v294 = vpop.xlane.xlu0 %293
    %v295 = vsel %vm279, %v156, 0.0
    %296 = vadd.xlane.f32.xlu0 %v295
    %v297 = vpop.xlane.xlu0 %296
    %v298 = vsel %vm279, %v157, 0.0
    %299 = vadd.xlane.f32.xlu0 %v298
    %v300 = vpop.xlane.xlu0 %299
    %v301 = vsel %vm279, %v158, 0.0
    %302 = vadd.xlane.f32.xlu0 %v301
    %v303 = vpop.xlane.xlu0 %302
    %v304 = vsel %vm279, %v159, 0.0
    %305 = vadd.xlane.f32.xlu0 %v304
    %v306 = vpop.xlane.xlu0 %305
    %v307 = vsel %vm279, %v160, 0.0
    %308 = vadd.xlane.f32.xlu0 %v307
    %v309 = vpop.xlane.xlu0 %308
    %v310 = vsel %vm279, %v161, 0.0
    %311 = vadd.xlane.f32.xlu0 %v310
    %v312 = vpop.xlane.xlu0 %311
    %v313 = vsel %vm279, %v162, 0.0
    %314 = vadd.xlane.f32.xlu0 %v313
    %v315 = vpop.xlane.xlu0 %314
    %v316 = vsel %vm279, %v163, 0.0
    %317 = vadd.xlane.f32.xlu0 %v316
    %v318 = vpop.xlane.xlu0 %317
    %v319 = vsel %vm279, %v164, 0.0
    %320 = vadd.xlane.f32.xlu0 %v319
    %v321 = vpop.xlane.xlu0 %320
    %v322 = vsel %vm279, %v165, 0.0
    %323 = vadd.xlane.f32.xlu0 %v322
    %v324 = vpop.xlane.xlu0 %323
    %v325 = vsel %vm279, %v166, 0.0
    %326 = vadd.xlane.f32.xlu0 %v325
    %v327 = vpop.xlane.xlu0 %326
    %v328 = vsel %vm279, %v167, 0.0
    %329 = vadd.xlane.f32.xlu0 %v328
    %v330 = vpop.xlane.xlu0 %329
    %v331 = vsel %vm279, %v168, 0.0
    %332 = vadd.xlane.f32.xlu0 %v331
    %v333 = vpop.xlane.xlu0 %332
    %v334 = vsel %vm279, %v169, 0.0
    %335 = vadd.xlane.f32.xlu0 %v334
    %v336 = vpop.xlane.xlu0 %335
    %v337 = vsel %vm279, %v170, 0.0
    %338 = vadd.xlane.f32.xlu0 %v337
    %v339 = vpop.xlane.xlu0 %338
    %v340 = vsel %vm279, %v171, 0.0
    %341 = vadd.xlane.f32.xlu0 %v340
    %v342 = vpop.xlane.xlu0 %341
    %v343 = vsel %vm279, %v172, 0.0
    %344 = vadd.xlane.f32.xlu0 %v343
    %v345 = vpop.xlane.xlu0 %344
    %v346 = vsel %vm279, %v173, 0.0
    %347 = vadd.xlane.f32.xlu0 %v346
    %v348 = vpop.xlane.xlu0 %347
    %v349 = vsel %vm279, %v174, 0.0
    %350 = vadd.xlane.f32.xlu0 %v349
    %v351 = vpop.xlane.xlu0 %350
    %v352 = vsel %vm279, %v175, 0.0
    %353 = vadd.xlane.f32.xlu0 %v352
    %v354 = vpop.xlane.xlu0 %353
    %v355 = vsel %vm279, %v176, 0.0
    %356 = vadd.xlane.f32.xlu0 %v355
    %v357 = vpop.xlane.xlu0 %356
    %v358 = vsel %vm279, %v177, 0.0
    %359 = vadd.xlane.f32.xlu0 %v358
    %v360 = vpop.xlane.xlu0 %359
    %v361 = vsel %vm279, %v178, 0.0
    %362 = vadd.xlane.f32.xlu0 %v361
    %v363 = vpop.xlane.xlu0 %362
    %v364 = vsel %vm279, %v179, 0.0
    %365 = vadd.xlane.f32.xlu0 %v364
    %v366 = vpop.xlane.xlu0 %365
    %v367 = vsel %vm279, %v180, 0.0
    %368 = vadd.xlane.f32.xlu0 %v367
    %v369 = vpop.xlane.xlu0 %368
    %v370 = vsel %vm279, %v181, 0.0
    %371 = vadd.xlane.f32.xlu0 %v370
    %v372 = vpop.xlane.xlu0 %371
    %v373 = vsel %vm279, %v182, 0.0
    %374 = vadd.xlane.f32.xlu0 %v373
    %v375 = vpop.xlane.xlu0 %374
    %v376 = vsel %vm279, %v183, 0.0
    %377 = vadd.xlane.f32.xlu0 %v376
    %v378 = vpop.xlane.xlu0 %377
    %v379 = vsel %vm279, %v184, 0.0
    %380 = vadd.xlane.f32.xlu0 %v379
    %v381 = vpop.xlane.xlu0 %380
    %v382 = vsel %vm279, %v185, 0.0
    %383 = vadd.xlane.f32.xlu0 %v382
    %v384 = vpop.xlane.xlu0 %383
    %v385 = vsel %vm279, %v186, 0.0
    %386 = vadd.xlane.f32.xlu0 %v385
    %v387 = vpop.xlane.xlu0 %386
    %v388 = vsel %vm279, %v187, 0.0
    %389 = vadd.xlane.f32.xlu0 %v388
    %v390 = vpop.xlane.xlu0 %389
    %v391 = vsel %vm279, %v188, 0.0
    %392 = vadd.xlane.f32.xlu0 %v391
    %v393 = vpop.xlane.xlu0 %392
    %v394 = vsel %vm279, %v189, 0.0
    %395 = vadd.xlane.f32.xlu0 %v394
    %v396 = vpop.xlane.xlu0 %395
    %v397 = vsel %vm279, %v190, 0.0
    %398 = vadd.xlane.f32.xlu0 %v397
    %v399 = vpop.xlane.xlu0 %398
    %v400 = vsel %vm279, %v191, 0.0
    %401 = vadd.xlane.f32.xlu0 %v400
    %v402 = vpop.xlane.xlu0 %401
    %v403 = vsel %vm279, %v192, 0.0
    %404 = vadd.xlane.f32.xlu0 %v403
    %v405 = vpop.xlane.xlu0 %404
    %v406 = vsel %vm279, %v193, 0.0
    %407 = vadd.xlane.f32.xlu0 %v406
    %v408 = vpop.xlane.xlu0 %407
    %v409 = vsel %vm279, %v194, 0.0
    %410 = vadd.xlane.f32.xlu0 %v409
    %v411 = vpop.xlane.xlu0 %410
    %v412 = vsel %vm279, %v195, 0.0
    %413 = vadd.xlane.f32.xlu0 %v412
    %v414 = vpop.xlane.xlu0 %413
    %v415 = vsel %vm279, %v196, 0.0
    %416 = vadd.xlane.f32.xlu0 %v415
    %v417 = vpop.xlane.xlu0 %416
    %v418 = vsel %vm279, %v197, 0.0
    %419 = vadd.xlane.f32.xlu0 %v418
    %v420 = vpop.xlane.xlu0 %419
    %v421 = vsel %vm279, %v198, 0.0
    %422 = vadd.xlane.f32.xlu0 %v421
    %v423 = vpop.xlane.xlu0 %422
    %v424 = vsel %vm279, %v199, 0.0
    %425 = vadd.xlane.f32.xlu0 %v424
    %v426 = vpop.xlane.xlu0 %425
    %v427 = vsel %vm279, %v200, 0.0
    %428 = vadd.xlane.f32.xlu0 %v427
    %v429 = vpop.xlane.xlu0 %428
    %v430 = vsel %vm279, %v201, 0.0
    %431 = vadd.xlane.f32.xlu0 %v430
    %v432 = vpop.xlane.xlu0 %431
    %v433 = vsel %vm279, %v202, 0.0
    %434 = vadd.xlane.f32.xlu0 %v433
    %v435 = vpop.xlane.xlu0 %434
    %v436 = vsel %vm279, %v203, 0.0
    %437 = vadd.xlane.f32.xlu0 %v436
    %v438 = vpop.xlane.xlu0 %437
    %v439 = vsel %vm279, %v204, 0.0
    %440 = vadd.xlane.f32.xlu0 %v439
    %v441 = vpop.xlane.xlu0 %440
    %v442 = vsel %vm279, %v205, 0.0
    %443 = vadd.xlane.f32.xlu0 %v442
    %v444 = vpop.xlane.xlu0 %443
    %v445 = vsel %vm279, %v206, 0.0
    %446 = vadd.xlane.f32.xlu0 %v445
    %v447 = vpop.xlane.xlu0 %446
    %v448 = vsel %vm279, %v207, 0.0
    %449 = vadd.xlane.f32.xlu0 %v448
    %v450 = vpop.xlane.xlu0 %449
    %v451 = vsel %vm279, %v208, 0.0
    %452 = vadd.xlane.f32.xlu0 %v451
    %v453 = vpop.xlane.xlu0 %452
    %v454 = vsel %vm279, %v209, 0.0
    %455 = vadd.xlane.f32.xlu0 %v454
    %v456 = vpop.xlane.xlu0 %455
    %v457 = vsel %vm279, %v210, 0.0
    %458 = vadd.xlane.f32.xlu0 %v457
    %v459 = vpop.xlane.xlu0 %458
    %v460 = vsel %vm279, %v211, 0.0
    %461 = vadd.xlane.f32.xlu0 %v460
    %v462 = vpop.xlane.xlu0 %461
    %v463 = vsel %vm279, %v212, 0.0
    %464 = vadd.xlane.f32.xlu0 %v463
    %v465 = vpop.xlane.xlu0 %464
    %v466 = vsel %vm279, %v213, 0.0
    %467 = vadd.xlane.f32.xlu0 %v466
    %v468 = vpop.xlane.xlu0 %467
    %v469 = vsel %vm279, %v214, 0.0
    %470 = vadd.xlane.f32.xlu0 %v469
    %v471 = vpop.xlane.xlu0 %470
    %v472 = vsel %vm279, %v215, 0.0
    %473 = vadd.xlane.f32.xlu0 %v472
    %v474 = vpop.xlane.xlu0 %473
    %v475 = vsel %vm279, %v216, 0.0
    %476 = vadd.xlane.f32.xlu0 %v475
    %v477 = vpop.xlane.xlu0 %476
    %v478 = vsel %vm279, %v217, 0.0
    %479 = vadd.xlane.f32.xlu0 %v478
    %v480 = vpop.xlane.xlu0 %479
    %v481 = vsel %vm279, %v218, 0.0
    %482 = vadd.xlane.f32.xlu0 %v481
    %v483 = vpop.xlane.xlu0 %482
    %v484 = vsel %vm279, %v219, 0.0
    %485 = vadd.xlane.f32.xlu0 %v484
    %v486 = vpop.xlane.xlu0 %485
    %v487 = vsel %vm279, %v220, 0.0
    %488 = vadd.xlane.f32.xlu0 %v487
    %v489 = vpop.xlane.xlu0 %488
    %v490 = vsel %vm279, %v221, 0.0
    %491 = vadd.xlane.f32.xlu0 %v490
    %v492 = vpop.xlane.xlu0 %491
    %v493 = vsel %vm279, %v222, 0.0
    %494 = vadd.xlane.f32.xlu0 %v493
    %v495 = vpop.xlane.xlu0 %494
    %v496 = vsel %vm279, %v223, 0.0
    %497 = vadd.xlane.f32.xlu0 %v496
    %v498 = vpop.xlane.xlu0 %497
    %v499 = vsel %vm279, %v224, 0.0
    %500 = vadd.xlane.f32.xlu0 %v499
    %v501 = vpop.xlane.xlu0 %500
    %v502 = vsel %vm279, %v225, 0.0
    %503 = vadd.xlane.f32.xlu0 %v502
    %v504 = vpop.xlane.xlu0 %503
    %v505 = vsel %vm279, %v226, 0.0
    %506 = vadd.xlane.f32.xlu0 %v505
    %v507 = vpop.xlane.xlu0 %506
    %v508 = vsel %vm279, %v227, 0.0
    %509 = vadd.xlane.f32.xlu0 %v508
    %v510 = vpop.xlane.xlu0 %509
    %v511 = vsel %vm279, %v228, 0.0
    %512 = vadd.xlane.f32.xlu0 %v511
    %v513 = vpop.xlane.xlu0 %512
    %v514 = vsel %vm279, %v229, 0.0
    %515 = vadd.xlane.f32.xlu0 %v514
    %v516 = vpop.xlane.xlu0 %515
    %v517 = vsel %vm279, %v230, 0.0
    %518 = vadd.xlane.f32.xlu0 %v517
    %v519 = vpop.xlane.xlu0 %518
    %v520 = vsel %vm279, %v231, 0.0
    %521 = vadd.xlane.f32.xlu0 %v520
    %v522 = vpop.xlane.xlu0 %521
    %v523 = vsel %vm279, %v232, 0.0
    %524 = vadd.xlane.f32.xlu0 %v523
    %v525 = vpop.xlane.xlu0 %524
    %v526 = vsel %vm279, %v233, 0.0
    %527 = vadd.xlane.f32.xlu0 %v526
    %v528 = vpop.xlane.xlu0 %527
    %v529 = vsel %vm279, %v234, 0.0
    %530 = vadd.xlane.f32.xlu0 %v529
    %v531 = vpop.xlane.xlu0 %530
    %v532 = vsel %vm279, %v235, 0.0
    %533 = vadd.xlane.f32.xlu0 %v532
    %v534 = vpop.xlane.xlu0 %533
    %v535 = vsel %vm279, %v236, 0.0
    %536 = vadd.xlane.f32.xlu0 %v535
    %v537 = vpop.xlane.xlu0 %536
    %v538 = vsel %vm279, %v237, 0.0
    %539 = vadd.xlane.f32.xlu0 %v538
    %v540 = vpop.xlane.xlu0 %539
    %v541 = vsel %vm279, %v238, 0.0
    %542 = vadd.xlane.f32.xlu0 %v541
    %v543 = vpop.xlane.xlu0 %542
    %v544 = vsel %vm279, %v239, 0.0
    %545 = vadd.xlane.f32.xlu0 %v544
    %v546 = vpop.xlane.xlu0 %545
    %v547 = vsel %vm279, %v240, 0.0
    %548 = vadd.xlane.f32.xlu0 %v547
    %v549 = vpop.xlane.xlu0 %548
    %v550 = vsel %vm279, %v241, 0.0
    %551 = vadd.xlane.f32.xlu0 %v550
    %v552 = vpop.xlane.xlu0 %551
    %v553 = vsel %vm279, %v242, 0.0
    %554 = vadd.xlane.f32.xlu0 %v553
    %v555 = vpop.xlane.xlu0 %554
    %v556 = vsel %vm279, %v243, 0.0
    %557 = vadd.xlane.f32.xlu0 %v556
    %v558 = vpop.xlane.xlu0 %557
    %v559 = vsel %vm279, %v244, 0.0
    %560 = vadd.xlane.f32.xlu0 %v559
    %v561 = vpop.xlane.xlu0 %560
    %v562 = vsel %vm279, %v245, 0.0
    %563 = vadd.xlane.f32.xlu0 %v562
    %v564 = vpop.xlane.xlu0 %563
    %v565 = vsel %vm279, %v246, 0.0
    %566 = vadd.xlane.f32.xlu0 %v565
    %v567 = vpop.xlane.xlu0 %566
    %v568 = vsel %vm279, %v247, 0.0
    %569 = vadd.xlane.f32.xlu0 %v568
    %v570 = vpop.xlane.xlu0 %569
    %v571 = vsel %vm279, %v248, 0.0
    %572 = vadd.xlane.f32.xlu0 %v571
    %v573 = vpop.xlane.xlu0 %572
    %v574 = vsel %vm279, %v249, 0.0
    %575 = vadd.xlane.f32.xlu0 %v574
    %v576 = vpop.xlane.xlu0 %575
    %v577 = vsel %vm279, %v250, 0.0
    %578 = vadd.xlane.f32.xlu0 %v577
    %v579 = vpop.xlane.xlu0 %578
    %v580 = vsel %vm279, %v251, 0.0
    %581 = vadd.xlane.f32.xlu0 %v580
    %v582 = vpop.xlane.xlu0 %581
    %v583 = vsel %vm279, %v252, 0.0
    %584 = vadd.xlane.f32.xlu0 %v583
    %v585 = vpop.xlane.xlu0 %584
    %v586 = vsel %vm279, %v253, 0.0
    %587 = vadd.xlane.f32.xlu0 %v586
    %v588 = vpop.xlane.xlu0 %587
    %v589 = vsel %vm279, %v254, 0.0
    %590 = vadd.xlane.f32.xlu0 %v589
    %v591 = vpop.xlane.xlu0 %590
    %v592 = vsel %vm279, %v255, 0.0
    %593 = vadd.xlane.f32.xlu0 %v592
    %v594 = vpop.xlane.xlu0 %593
    %v595 = vsel %vm279, %v256, 0.0
    %596 = vadd.xlane.f32.xlu0 %v595
    %v597 = vpop.xlane.xlu0 %596
    %v598 = vsel %vm279, %v257, 0.0
    %599 = vadd.xlane.f32.xlu0 %v598
    %v600 = vpop.xlane.xlu0 %599
    %v601 = vsel %vm279, %v258, 0.0
    %602 = vadd.xlane.f32.xlu0 %v601
    %v603 = vpop.xlane.xlu0 %602
    %v604 = vsel %vm279, %v259, 0.0
    %605 = vadd.xlane.f32.xlu0 %v604
    %v606 = vpop.xlane.xlu0 %605
    %v607 = vsel %vm279, %v260, 0.0
    %608 = vadd.xlane.f32.xlu0 %v607
    %v609 = vpop.xlane.xlu0 %608
    %v610 = vsel %vm279, %v261, 0.0
    %611 = vadd.xlane.f32.xlu0 %v610
    %v612 = vpop.xlane.xlu0 %611
    %v613 = vsel %vm279, %v262, 0.0
    %614 = vadd.xlane.f32.xlu0 %v613
    %v615 = vpop.xlane.xlu0 %614
    %v616 = vsel %vm279, %v263, 0.0
    %617 = vadd.xlane.f32.xlu0 %v616
    %v618 = vpop.xlane.xlu0 %617
    %v619 = vsel %vm279, %v264, 0.0
    %620 = vadd.xlane.f32.xlu0 %v619
    %v621 = vpop.xlane.xlu0 %620
    %v622 = vsel %vm279, %v265, 0.0
    %623 = vadd.xlane.f32.xlu0 %v622
    %v624 = vpop.xlane.xlu0 %623
    %v625 = vsel %vm279, %v266, 0.0
    %626 = vadd.xlane.f32.xlu0 %v625
    %v627 = vpop.xlane.xlu0 %626
    %v628 = vsel %vm279, %v267, 0.0
    %629 = vadd.xlane.f32.xlu0 %v628
    %v630 = vpop.xlane.xlu0 %629
    %v631 = vsel %vm279, %v268, 0.0
    %632 = vadd.xlane.f32.xlu0 %v631
    %v633 = vpop.xlane.xlu0 %632
    %v634 = vsel %vm279, %v269, 0.0
    %635 = vadd.xlane.f32.xlu0 %v634
    %v636 = vpop.xlane.xlu0 %635
    %v637 = vsel %vm279, %v270, 0.0
    %638 = vadd.xlane.f32.xlu0 %v637
    %v639 = vpop.xlane.xlu0 %638
    %v640 = vsel %vm279, %v271, 0.0
    %641 = vadd.xlane.f32.xlu0 %v640
    %v642 = vpop.xlane.xlu0 %641
    %v643 = vsel %vm279, %v272, 0.0
    %644 = vadd.xlane.f32.xlu0 %v643
    %v645 = vpop.xlane.xlu0 %644
    %v646 = vsel %vm279, %v273, 0.0
    %647 = vadd.xlane.f32.xlu0 %v646
    %v648 = vpop.xlane.xlu0 %647
    %v649 = vsel %vm279, %v274, 0.0
    %650 = vadd.xlane.f32.xlu0 %v649
    %v651 = vpop.xlane.xlu0 %650
    %v652 = vsel %vm279, %v275, 0.0
    %653 = vadd.xlane.f32.xlu0 %v652
    %v654 = vpop.xlane.xlu0 %653
    %v655 = vsel %vm279, %v276, 0.0
    %656 = vadd.xlane.f32.xlu0 %v655
    %v657 = vpop.xlane.xlu0 %656
    %v658 = vsel %vm279, %v277, 0.0
    %659 = vadd.xlane.f32.xlu0 %v658
    %v660 = vpop.xlane.xlu0 %659
    %v661 = vsel %vm279, %v278, 0.0
    %662 = vadd.xlane.f32.xlu0 %v661
    %v663 = vpop.xlane.xlu0 %662
    %s664 = sld [smem:[#allocation2]]
    %v665 = vstv %s664
    %v666 = vadd.f32 %v282, %v665
    %v667 = vadd.f32 %v285, %v665
    %v668 = vadd.f32 %v288, %v665
    %v669 = vadd.f32 %v291, %v665
    %v670 = vadd.f32 %v294, %v665
    %v671 = vadd.f32 %v297, %v665
    %v672 = vadd.f32 %v300, %v665
    %v673 = vadd.f32 %v303, %v665
    %v674 = vadd.f32 %v306, %v665
    %v675 = vadd.f32 %v309, %v665
    %v676 = vadd.f32 %v312, %v665
    %v677 = vadd.f32 %v315, %v665
    %v678 = vadd.f32 %v318, %v665
    %v679 = vadd.f32 %v321, %v665
    %v680 = vadd.f32 %v324, %v665
    %v681 = vadd.f32 %v327, %v665
    %v682 = vadd.f32 %v330, %v665
    %v683 = vadd.f32 %v333, %v665
    %v684 = vadd.f32 %v336, %v665
    %v685 = vadd.f32 %v339, %v665
    %v686 = vadd.f32 %v342, %v665
    %v687 = vadd.f32 %v345, %v665
    %v688 = vadd.f32 %v348, %v665
    %v689 = vadd.f32 %v351, %v665
    %v690 = vadd.f32 %v354, %v665
    %v691 = vadd.f32 %v357, %v665
    %v692 = vadd.f32 %v360, %v665
    %v693 = vadd.f32 %v363, %v665
    %v694 = vadd.f32 %v366, %v665
    %v695 = vadd.f32 %v369, %v665
    %v696 = vadd.f32 %v372, %v665
    %v697 = vadd.f32 %v375, %v665
    %v698 = vadd.f32 %v378, %v665
    %v699 = vadd.f32 %v381, %v665
    %v700 = vadd.f32 %v384, %v665
    %v701 = vadd.f32 %v387, %v665
    %v702 = vadd.f32 %v390, %v665
    %v703 = vadd.f32 %v393, %v665
    %v704 = vadd.f32 %v396, %v665
    %v705 = vadd.f32 %v399, %v665
    %v706 = vadd.f32 %v402, %v665
    %v707 = vadd.f32 %v405, %v665
    %v708 = vadd.f32 %v408, %v665
    %v709 = vadd.f32 %v411, %v665
    %v710 = vadd.f32 %v414, %v665
    %v711 = vadd.f32 %v417, %v665
    %v712 = vadd.f32 %v420, %v665
    %v713 = vadd.f32 %v423, %v665
    %v714 = vadd.f32 %v426, %v665
    %v715 = vadd.f32 %v429, %v665
    %v716 = vadd.f32 %v432, %v665
    %v717 = vadd.f32 %v435, %v665
    %v718 = vadd.f32 %v438, %v665
    %v719 = vadd.f32 %v441, %v665
    %v720 = vadd.f32 %v444, %v665
    %v721 = vadd.f32 %v447, %v665
    %v722 = vadd.f32 %v450, %v665
    %v723 = vadd.f32 %v453, %v665
    %v724 = vadd.f32 %v456, %v665
    %v725 = vadd.f32 %v459, %v665
    %v726 = vadd.f32 %v462, %v665
    %v727 = vadd.f32 %v465, %v665
    %v728 = vadd.f32 %v468, %v665
    %v729 = vadd.f32 %v471, %v665
    %v730 = vadd.f32 %v474, %v665
    %v731 = vadd.f32 %v477, %v665
    %v732 = vadd.f32 %v480, %v665
    %v733 = vadd.f32 %v483, %v665
    %v734 = vadd.f32 %v486, %v665
    %v735 = vadd.f32 %v489, %v665
    %v736 = vadd.f32 %v492, %v665
    %v737 = vadd.f32 %v495, %v665
    %v738 = vadd.f32 %v498, %v665
    %v739 = vadd.f32 %v501, %v665
    %v740 = vadd.f32 %v504, %v665
    %v741 = vadd.f32 %v507, %v665
    %v742 = vadd.f32 %v510, %v665
    %v743 = vadd.f32 %v513, %v665
    %v744 = vadd.f32 %v516, %v665
    %v745 = vadd.f32 %v519, %v665
    %v746 = vadd.f32 %v522, %v665
    %v747 = vadd.f32 %v525, %v665
    %v748 = vadd.f32 %v528, %v665
    %v749 = vadd.f32 %v531, %v665
    %v750 = vadd.f32 %v534, %v665
    %v751 = vadd.f32 %v537, %v665
    %v752 = vadd.f32 %v540, %v665
    %v753 = vadd.f32 %v543, %v665
    %v754 = vadd.f32 %v546, %v665
    %v755 = vadd.f32 %v549, %v665
    %v756 = vadd.f32 %v552, %v665
    %v757 = vadd.f32 %v555, %v665
    %v758 = vadd.f32 %v558, %v665
    %v759 = vadd.f32 %v561, %v665
    %v760 = vadd.f32 %v564, %v665
    %v761 = vadd.f32 %v567, %v665
    %v762 = vadd.f32 %v570, %v665
    %v763 = vadd.f32 %v573, %v665
    %v764 = vadd.f32 %v576, %v665
    %v765 = vadd.f32 %v579, %v665
    %v766 = vadd.f32 %v582, %v665
    %v767 = vadd.f32 %v585, %v665
    %v768 = vadd.f32 %v588, %v665
    %v769 = vadd.f32 %v591, %v665
    %v770 = vadd.f32 %v594, %v665
    %v771 = vadd.f32 %v597, %v665
    %v772 = vadd.f32 %v600, %v665
    %v773 = vadd.f32 %v603, %v665
    %v774 = vadd.f32 %v606, %v665
    %v775 = vadd.f32 %v609, %v665
    %v776 = vadd.f32 %v612, %v665
    %v777 = vadd.f32 %v615, %v665
    %v778 = vadd.f32 %v618, %v665
    %v779 = vadd.f32 %v621, %v665
    %v780 = vadd.f32 %v624, %v665
    %v781 = vadd.f32 %v627, %v665
    %v782 = vadd.f32 %v630, %v665
    %v783 = vadd.f32 %v633, %v665
    %v784 = vadd.f32 %v636, %v665
    %v785 = vadd.f32 %v639, %v665
    %v786 = vadd.f32 %v642, %v665
    %v787 = vadd.f32 %v645, %v665
    %v788 = vadd.f32 %v648, %v665
    %v789 = vadd.f32 %v651, %v665
    %v790 = vadd.f32 %v654, %v665
    %v791 = vadd.f32 %v657, %v665
    %v792 = vadd.f32 %v660, %v665
    %v793 = vadd.f32 %v663, %v665
    %v810 = vlaneseq
    %v811 = vand.u32 %v810, 127
    %v812 = vlaneseq
    %v813 = vshrl.u32 %v812, 7
    %v814 = vsub.s32 %v811, %v813
    %v815 = vrot.slane %v666, %v814
    %v816 = vadd.s32 %v811, 4294967288
    %v817 = vlaneseq
    %v818 = vshrl.u32 %v817, 7
    %v819 = vsub.s32 %v816, %v818
    %v820 = vrot.slane %v667, %v819
    %vm821 = vcmask 130112
    %v822 = vsel %vm821, %v820, %v815
    %v823 = vadd.s32 %v811, 4294967280
    %v824 = vlaneseq
    %v825 = vshrl.u32 %v824, 7
    %v826 = vsub.s32 %v823, %v825
    %v827 = vrot.slane %v668, %v826
    %vm828 = vcmask 195712
    %v829 = vsel %vm828, %v827, %v822
    %v830 = vadd.s32 %v811, 4294967272
    %v831 = vlaneseq
    %v832 = vshrl.u32 %v831, 7
    %v833 = vsub.s32 %v830, %v832
    %v834 = vrot.slane %v669, %v833
    %vm835 = vcmask 261312
    %v836 = vsel %vm835, %v834, %v829
    %v837 = vadd.s32 %v811, 4294967264
    %v838 = vlaneseq
    %v839 = vshrl.u32 %v838, 7
    %v840 = vsub.s32 %v837, %v839
    %v841 = vrot.slane %v670, %v840
    %vm842 = vcmask 326912
    %v843 = vsel %vm842, %v841, %v836
    %v844 = vadd.s32 %v811, 4294967256
    %v845 = vlaneseq
    %v846 = vshrl.u32 %v845, 7
    %v847 = vsub.s32 %v844, %v846
    %v848 = vrot.slane %v671, %v847
    %vm849 = vcmask 392512
    %v850 = vsel %vm849, %v848, %v843
    %v851 = vadd.s32 %v811, 4294967248
    %v852 = vlaneseq
    %v853 = vshrl.u32 %v852, 7
    %v854 = vsub.s32 %v851, %v853
    %v855 = vrot.slane %v672, %v854
    %vm856 = vcmask 458112
    %v857 = vsel %vm856, %v855, %v850
    %v858 = vadd.s32 %v811, 4294967240
    %v859 = vlaneseq
    %v860 = vshrl.u32 %v859, 7
    %v861 = vsub.s32 %v858, %v860
    %v862 = vrot.slane %v673, %v861
    %vm863 = vcmask 523712
    %v864 = vsel %vm863, %v862, %v857
    %v865 = vadd.s32 %v811, 4294967232
    %v866 = vlaneseq
    %v867 = vshrl.u32 %v866, 7
    %v868 = vsub.s32 %v865, %v867
    %v869 = vrot.slane %v674, %v868
    %vm870 = vcmask 589312
    %v871 = vsel %vm870, %v869, %v864
    %v872 = vadd.s32 %v811, 4294967224
    %v873 = vlaneseq
    %v874 = vshrl.u32 %v873, 7
    %v875 = vsub.s32 %v872, %v874
    %v876 = vrot.slane %v675, %v875
    %vm877 = vcmask 654912
    %v878 = vsel %vm877, %v876, %v871
    %v879 = vadd.s32 %v811, 4294967216
    %v880 = vlaneseq
    %v881 = vshrl.u32 %v880, 7
    %v882 = vsub.s32 %v879, %v881
    %v883 = vrot.slane %v676, %v882
    %vm884 = vcmask 720512
    %v885 = vsel %vm884, %v883, %v878
    %v886 = vadd.s32 %v811, 4294967208
    %v887 = vlaneseq
    %v888 = vshrl.u32 %v887, 7
    %v889 = vsub.s32 %v886, %v888
    %v890 = vrot.slane %v677, %v889
    %vm891 = vcmask 786112
    %v892 = vsel %vm891, %v890, %v885
    %v893 = vadd.s32 %v811, 4294967200
    %v894 = vlaneseq
    %v895 = vshrl.u32 %v894, 7
    %v896 = vsub.s32 %v893, %v895
    %v897 = vrot.slane %v678, %v896
    %vm898 = vcmask 851712
    %v899 = vsel %vm898, %v897, %v892
    %v900 = vadd.s32 %v811, 4294967192
    %v901 = vlaneseq
    %v902 = vshrl.u32 %v901, 7
    %v903 = vsub.s32 %v900, %v902
    %v904 = vrot.slane %v679, %v903
    %vm905 = vcmask 917312
    %v906 = vsel %vm905, %v904, %v899
    %v907 = vadd.s32 %v811, 4294967184
    %v908 = vlaneseq
    %v909 = vshrl.u32 %v908, 7
    %v910 = vsub.s32 %v907, %v909
    %v911 = vrot.slane %v680, %v910
    %vm912 = vcmask 982912
    %v913 = vsel %vm912, %v911, %v906
    %v914 = vadd.s32 %v811, 4294967176
    %v915 = vlaneseq
    %v916 = vshrl.u32 %v915, 7
    %v917 = vsub.s32 %v914, %v916
    %v918 = vrot.slane %v681, %v917
    %vm919 = vcmask 1048512
    %v920 = vsel %vm919, %v918, %v913
    %921 = vst [vmem:[#allocation3] ss:$8 sm:$0x1] %v920
    %922 = vst [vmem:[#allocation3] ss:$8 sm:$0x0] %v920
    %v939 = vlaneseq
    %v940 = vshrl.u32 %v939, 7
    %v941 = vsub.s32 %v811, %v940
    %v942 = vrot.slane %v682, %v941
    %v943 = vlaneseq
    %v944 = vshrl.u32 %v943, 7
    %v945 = vsub.s32 %v816, %v944
    %v946 = vrot.slane %v683, %v945
    %v947 = vsel %vm821, %v946, %v942
    %v948 = vlaneseq
    %v949 = vshrl.u32 %v948, 7
    %v950 = vsub.s32 %v823, %v949
    %v951 = vrot.slane %v684, %v950
    %v952 = vsel %vm828, %v951, %v947
    %v953 = vlaneseq
    %v954 = vshrl.u32 %v953, 7
    %v955 = vsub.s32 %v830, %v954
    %v956 = vrot.slane %v685, %v955
    %v957 = vsel %vm835, %v956, %v952
    %v958 = vlaneseq
    %v959 = vshrl.u32 %v958, 7
    %v960 = vsub.s32 %v837, %v959
    %v961 = vrot.slane %v686, %v960
    %v962 = vsel %vm842, %v961, %v957
    %v963 = vlaneseq
    %v964 = vshrl.u32 %v963, 7
    %v965 = vsub.s32 %v844, %v964
    %v966 = vrot.slane %v687, %v965
    %v967 = vsel %vm849, %v966, %v962
    %v968 = vlaneseq
    %v969 = vshrl.u32 %v968, 7
    %v970 = vsub.s32 %v851, %v969
    %v971 = vrot.slane %v688, %v970
    %v972 = vsel %vm856, %v971, %v967
    %v973 = vlaneseq
    %v974 = vshrl.u32 %v973, 7
    %v975 = vsub.s32 %v858, %v974
    %v976 = vrot.slane %v689, %v975
    %v977 = vsel %vm863, %v976, %v972
    %v978 = vlaneseq
    %v979 = vshrl.u32 %v978, 7
    %v980 = vsub.s32 %v865, %v979
    %v981 = vrot.slane %v690, %v980
    %v982 = vsel %vm870, %v981, %v977
    %v983 = vlaneseq
    %v984 = vshrl.u32 %v983, 7
    %v985 = vsub.s32 %v872, %v984
    %v986 = vrot.slane %v691, %v985
    %v987 = vsel %vm877, %v986, %v982
    %v988 = vlaneseq
    %v989 = vshrl.u32 %v988, 7
    %v990 = vsub.s32 %v879, %v989
    %v991 = vrot.slane %v692, %v990
    %v992 = vsel %vm884, %v991, %v987
    %v993 = vlaneseq
    %v994 = vshrl.u32 %v993, 7
    %v995 = vsub.s32 %v886, %v994
    %v996 = vrot.slane %v693, %v995
    %v997 = vsel %vm891, %v996, %v992
    %v998 = vlaneseq
    %v999 = vshrl.u32 %v998, 7
    %v1000 = vsub.s32 %v893, %v999
    %v1001 = vrot.slane %v694, %v1000
    %v1002 = vsel %vm898, %v1001, %v997
    %v1003 = vlaneseq
    %v1004 = vshrl.u32 %v1003, 7
    %v1005 = vsub.s32 %v900, %v1004
    %v1006 = vrot.slane %v695, %v1005
    %v1007 = vsel %vm905, %v1006, %v1002
    %v1008 = vlaneseq
    %v1009 = vshrl.u32 %v1008, 7
    %v1010 = vsub.s32 %v907, %v1009
    %v1011 = vrot.slane %v696, %v1010
    %v1012 = vsel %vm912, %v1011, %v1007
    %v1013 = vlaneseq
    %v1014 = vshrl.u32 %v1013, 7
    %v1015 = vsub.s32 %v914, %v1014
    %v1016 = vrot.slane %v697, %v1015
    %v1017 = vsel %vm919, %v1016, %v1012
    %s1018 = scalar_lea.vmem [#allocation3], 1
    %1019 = vst [vmem:[%s1018] ss:$8 sm:$0x1] %v1017
    %1020 = vst [vmem:[%s1018] ss:$8 sm:$0x0] %v1017
    %v1037 = vlaneseq
    %v1038 = vshrl.u32 %v1037, 7
    %v1039 = vsub.s32 %v811, %v1038
    %v1040 = vrot.slane %v698, %v1039
    %v1041 = vlaneseq
    %v1042 = vshrl.u32 %v1041, 7
    %v1043 = vsub.s32 %v816, %v1042
    %v1044 = vrot.slane %v699, %v1043
    %v1045 = vsel %vm821, %v1044, %v1040
    %v1046 = vlaneseq
    %v1047 = vshrl.u32 %v1046, 7
    %v1048 = vsub.s32 %v823, %v1047
    %v1049 = vrot.slane %v700, %v1048
    %v1050 = vsel %vm828, %v1049, %v1045
    %v1051 = vlaneseq
    %v1052 = vshrl.u32 %v1051, 7
    %v1053 = vsub.s32 %v830, %v1052
    %v1054 = vrot.slane %v701, %v1053
    %v1055 = vsel %vm835, %v1054, %v1050
    %v1056 = vlaneseq
    %v1057 = vshrl.u32 %v1056, 7
    %v1058 = vsub.s32 %v837, %v1057
    %v1059 = vrot.slane %v702, %v1058
    %v1060 = vsel %vm842, %v1059, %v1055
    %v1061 = vlaneseq
    %v1062 = vshrl.u32 %v1061, 7
    %v1063 = vsub.s32 %v844, %v1062
    %v1064 = vrot.slane %v703, %v1063
    %v1065 = vsel %vm849, %v1064, %v1060
    %v1066 = vlaneseq
    %v1067 = vshrl.u32 %v1066, 7
    %v1068 = vsub.s32 %v851, %v1067
    %v1069 = vrot.slane %v704, %v1068
    %v1070 = vsel %vm856, %v1069, %v1065
    %v1071 = vlaneseq
    %v1072 = vshrl.u32 %v1071, 7
    %v1073 = vsub.s32 %v858, %v1072
    %v1074 = vrot.slane %v705, %v1073
    %v1075 = vsel %vm863, %v1074, %v1070
    %v1076 = vlaneseq
    %v1077 = vshrl.u32 %v1076, 7
    %v1078 = vsub.s32 %v865, %v1077
    %v1079 = vrot.slane %v706, %v1078
    %v1080 = vsel %vm870, %v1079, %v1075
    %v1081 = vlaneseq
    %v1082 = vshrl.u32 %v1081, 7
    %v1083 = vsub.s32 %v872, %v1082
    %v1084 = vrot.slane %v707, %v1083
    %v1085 = vsel %vm877, %v1084, %v1080
    %v1086 = vlaneseq
    %v1087 = vshrl.u32 %v1086, 7
    %v1088 = vsub.s32 %v879, %v1087
    %v1089 = vrot.slane %v708, %v1088
    %v1090 = vsel %vm884, %v1089, %v1085
    %v1091 = vlaneseq
    %v1092 = vshrl.u32 %v1091, 7
    %v1093 = vsub.s32 %v886, %v1092
    %v1094 = vrot.slane %v709, %v1093
    %v1095 = vsel %vm891, %v1094, %v1090
    %v1096 = vlaneseq
    %v1097 = vshrl.u32 %v1096, 7
    %v1098 = vsub.s32 %v893, %v1097
    %v1099 = vrot.slane %v710, %v1098
    %v1100 = vsel %vm898, %v1099, %v1095
    %v1101 = vlaneseq
    %v1102 = vshrl.u32 %v1101, 7
    %v1103 = vsub.s32 %v900, %v1102
    %v1104 = vrot.slane %v711, %v1103
    %v1105 = vsel %vm905, %v1104, %v1100
    %v1106 = vlaneseq
    %v1107 = vshrl.u32 %v1106, 7
    %v1108 = vsub.s32 %v907, %v1107
    %v1109 = vrot.slane %v712, %v1108
    %v1110 = vsel %vm912, %v1109, %v1105
    %v1111 = vlaneseq
    %v1112 = vshrl.u32 %v1111, 7
    %v1113 = vsub.s32 %v914, %v1112
    %v1114 = vrot.slane %v713, %v1113
    %v1115 = vsel %vm919, %v1114, %v1110
    %s1116 = scalar_lea.vmem [#allocation3], 2
    %1117 = vst [vmem:[%s1116] ss:$8 sm:$0x1] %v1115
    %1118 = vst [vmem:[%s1116] ss:$8 sm:$0x0] %v1115
    %v1135 = vlaneseq
    %v1136 = vshrl.u32 %v1135, 7
    %v1137 = vsub.s32 %v811, %v1136
    %v1138 = vrot.slane %v714, %v1137
    %v1139 = vlaneseq
    %v1140 = vshrl.u32 %v1139, 7
    %v1141 = vsub.s32 %v816, %v1140
    %v1142 = vrot.slane %v715, %v1141
    %v1143 = vsel %vm821, %v1142, %v1138
    %v1144 = vlaneseq
    %v1145 = vshrl.u32 %v1144, 7
    %v1146 = vsub.s32 %v823, %v1145
    %v1147 = vrot.slane %v716, %v1146
    %v1148 = vsel %vm828, %v1147, %v1143
    %v1149 = vlaneseq
    %v1150 = vshrl.u32 %v1149, 7
    %v1151 = vsub.s32 %v830, %v1150
    %v1152 = vrot.slane %v717, %v1151
    %v1153 = vsel %vm835, %v1152, %v1148
    %v1154 = vlaneseq
    %v1155 = vshrl.u32 %v1154, 7
    %v1156 = vsub.s32 %v837, %v1155
    %v1157 = vrot.slane %v718, %v1156
    %v1158 = vsel %vm842, %v1157, %v1153
    %v1159 = vlaneseq
    %v1160 = vshrl.u32 %v1159, 7
    %v1161 = vsub.s32 %v844, %v1160
    %v1162 = vrot.slane %v719, %v1161
    %v1163 = vsel %vm849, %v1162, %v1158
    %v1164 = vlaneseq
    %v1165 = vshrl.u32 %v1164, 7
    %v1166 = vsub.s32 %v851, %v1165
    %v1167 = vrot.slane %v720, %v1166
    %v1168 = vsel %vm856, %v1167, %v1163
    %v1169 = vlaneseq
    %v1170 = vshrl.u32 %v1169, 7
    %v1171 = vsub.s32 %v858, %v1170
    %v1172 = vrot.slane %v721, %v1171
    %v1173 = vsel %vm863, %v1172, %v1168
    %v1174 = vlaneseq
    %v1175 = vshrl.u32 %v1174, 7
    %v1176 = vsub.s32 %v865, %v1175
    %v1177 = vrot.slane %v722, %v1176
    %v1178 = vsel %vm870, %v1177, %v1173
    %v1179 = vlaneseq
    %v1180 = vshrl.u32 %v1179, 7
    %v1181 = vsub.s32 %v872, %v1180
    %v1182 = vrot.slane %v723, %v1181
    %v1183 = vsel %vm877, %v1182, %v1178
    %v1184 = vlaneseq
    %v1185 = vshrl.u32 %v1184, 7
    %v1186 = vsub.s32 %v879, %v1185
    %v1187 = vrot.slane %v724, %v1186
    %v1188 = vsel %vm884, %v1187, %v1183
    %v1189 = vlaneseq
    %v1190 = vshrl.u32 %v1189, 7
    %v1191 = vsub.s32 %v886, %v1190
    %v1192 = vrot.slane %v725, %v1191
    %v1193 = vsel %vm891, %v1192, %v1188
    %v1194 = vlaneseq
    %v1195 = vshrl.u32 %v1194, 7
    %v1196 = vsub.s32 %v893, %v1195
    %v1197 = vrot.slane %v726, %v1196
    %v1198 = vsel %vm898, %v1197, %v1193
    %v1199 = vlaneseq
    %v1200 = vshrl.u32 %v1199, 7
    %v1201 = vsub.s32 %v900, %v1200
    %v1202 = vrot.slane %v727, %v1201
    %v1203 = vsel %vm905, %v1202, %v1198
    %v1204 = vlaneseq
    %v1205 = vshrl.u32 %v1204, 7
    %v1206 = vsub.s32 %v907, %v1205
    %v1207 = vrot.slane %v728, %v1206
    %v1208 = vsel %vm912, %v1207, %v1203
    %v1209 = vlaneseq
    %v1210 = vshrl.u32 %v1209, 7
    %v1211 = vsub.s32 %v914, %v1210
    %v1212 = vrot.slane %v729, %v1211
    %v1213 = vsel %vm919, %v1212, %v1208
    %s1214 = scalar_lea.vmem [#allocation3], 3
    %1215 = vst [vmem:[%s1214] ss:$8 sm:$0x1] %v1213
    %1216 = vst [vmem:[%s1214] ss:$8 sm:$0x0] %v1213
    %v1233 = vlaneseq
    %v1234 = vshrl.u32 %v1233, 7
    %v1235 = vsub.s32 %v811, %v1234
    %v1236 = vrot.slane %v730, %v1235
    %v1237 = vlaneseq
    %v1238 = vshrl.u32 %v1237, 7
    %v1239 = vsub.s32 %v816, %v1238
    %v1240 = vrot.slane %v731, %v1239
    %v1241 = vsel %vm821, %v1240, %v1236
    %v1242 = vlaneseq
    %v1243 = vshrl.u32 %v1242, 7
    %v1244 = vsub.s32 %v823, %v1243
    %v1245 = vrot.slane %v732, %v1244
    %v1246 = vsel %vm828, %v1245, %v1241
    %v1247 = vlaneseq
    %v1248 = vshrl.u32 %v1247, 7
    %v1249 = vsub.s32 %v830, %v1248
    %v1250 = vrot.slane %v733, %v1249
    %v1251 = vsel %vm835, %v1250, %v1246
    %v1252 = vlaneseq
    %v1253 = vshrl.u32 %v1252, 7
    %v1254 = vsub.s32 %v837, %v1253
    %v1255 = vrot.slane %v734, %v1254
    %v1256 = vsel %vm842, %v1255, %v1251
    %v1257 = vlaneseq
    %v1258 = vshrl.u32 %v1257, 7
    %v1259 = vsub.s32 %v844, %v1258
    %v1260 = vrot.slane %v735, %v1259
    %v1261 = vsel %vm849, %v1260, %v1256
    %v1262 = vlaneseq
    %v1263 = vshrl.u32 %v1262, 7
    %v1264 = vsub.s32 %v851, %v1263
    %v1265 = vrot.slane %v736, %v1264
    %v1266 = vsel %vm856, %v1265, %v1261
    %v1267 = vlaneseq
    %v1268 = vshrl.u32 %v1267, 7
    %v1269 = vsub.s32 %v858, %v1268
    %v1270 = vrot.slane %v737, %v1269
    %v1271 = vsel %vm863, %v1270, %v1266
    %v1272 = vlaneseq
    %v1273 = vshrl.u32 %v1272, 7
    %v1274 = vsub.s32 %v865, %v1273
    %v1275 = vrot.slane %v738, %v1274
    %v1276 = vsel %vm870, %v1275, %v1271
    %v1277 = vlaneseq
    %v1278 = vshrl.u32 %v1277, 7
    %v1279 = vsub.s32 %v872, %v1278
    %v1280 = vrot.slane %v739, %v1279
    %v1281 = vsel %vm877, %v1280, %v1276
    %v1282 = vlaneseq
    %v1283 = vshrl.u32 %v1282, 7
    %v1284 = vsub.s32 %v879, %v1283
    %v1285 = vrot.slane %v740, %v1284
    %v1286 = vsel %vm884, %v1285, %v1281
    %v1287 = vlaneseq
    %v1288 = vshrl.u32 %v1287, 7
    %v1289 = vsub.s32 %v886, %v1288
    %v1290 = vrot.slane %v741, %v1289
    %v1291 = vsel %vm891, %v1290, %v1286
    %v1292 = vlaneseq
    %v1293 = vshrl.u32 %v1292, 7
    %v1294 = vsub.s32 %v893, %v1293
    %v1295 = vrot.slane %v742, %v1294
    %v1296 = vsel %vm898, %v1295, %v1291
    %v1297 = vlaneseq
    %v1298 = vshrl.u32 %v1297, 7
    %v1299 = vsub.s32 %v900, %v1298
    %v1300 = vrot.slane %v743, %v1299
    %v1301 = vsel %vm905, %v1300, %v1296
    %v1302 = vlaneseq
    %v1303 = vshrl.u32 %v1302, 7
    %v1304 = vsub.s32 %v907, %v1303
    %v1305 = vrot.slane %v744, %v1304
    %v1306 = vsel %vm912, %v1305, %v1301
    %v1307 = vlaneseq
    %v1308 = vshrl.u32 %v1307, 7
    %v1309 = vsub.s32 %v914, %v1308
    %v1310 = vrot.slane %v745, %v1309
    %v1311 = vsel %vm919, %v1310, %v1306
    %s1312 = scalar_lea.vmem [#allocation3], 4
    %1313 = vst [vmem:[%s1312] ss:$8 sm:$0x1] %v1311
    %1314 = vst [vmem:[%s1312] ss:$8 sm:$0x0] %v1311
    %v1331 = vlaneseq
    %v1332 = vshrl.u32 %v1331, 7
    %v1333 = vsub.s32 %v811, %v1332
    %v1334 = vrot.slane %v746, %v1333
    %v1335 = vlaneseq
    %v1336 = vshrl.u32 %v1335, 7
    %v1337 = vsub.s32 %v816, %v1336
    %v1338 = vrot.slane %v747, %v1337
    %v1339 = vsel %vm821, %v1338, %v1334
    %v1340 = vlaneseq
    %v1341 = vshrl.u32 %v1340, 7
    %v1342 = vsub.s32 %v823, %v1341
    %v1343 = vrot.slane %v748, %v1342
    %v1344 = vsel %vm828, %v1343, %v1339
    %v1345 = vlaneseq
    %v1346 = vshrl.u32 %v1345, 7
    %v1347 = vsub.s32 %v830, %v1346
    %v1348 = vrot.slane %v749, %v1347
    %v1349 = vsel %vm835, %v1348, %v1344
    %v1350 = vlaneseq
    %v1351 = vshrl.u32 %v1350, 7
    %v1352 = vsub.s32 %v837, %v1351
    %v1353 = vrot.slane %v750, %v1352
    %v1354 = vsel %vm842, %v1353, %v1349
    %v1355 = vlaneseq
    %v1356 = vshrl.u32 %v1355, 7
    %v1357 = vsub.s32 %v844, %v1356
    %v1358 = vrot.slane %v751, %v1357
    %v1359 = vsel %vm849, %v1358, %v1354
    %v1360 = vlaneseq
    %v1361 = vshrl.u32 %v1360, 7
    %v1362 = vsub.s32 %v851, %v1361
    %v1363 = vrot.slane %v752, %v1362
    %v1364 = vsel %vm856, %v1363, %v1359
    %v1365 = vlaneseq
    %v1366 = vshrl.u32 %v1365, 7
    %v1367 = vsub.s32 %v858, %v1366
    %v1368 = vrot.slane %v753, %v1367
    %v1369 = vsel %vm863, %v1368, %v1364
    %v1370 = vlaneseq
    %v1371 = vshrl.u32 %v1370, 7
    %v1372 = vsub.s32 %v865, %v1371
    %v1373 = vrot.slane %v754, %v1372
    %v1374 = vsel %vm870, %v1373, %v1369
    %v1375 = vlaneseq
    %v1376 = vshrl.u32 %v1375, 7
    %v1377 = vsub.s32 %v872, %v1376
    %v1378 = vrot.slane %v755, %v1377
    %v1379 = vsel %vm877, %v1378, %v1374
    %v1380 = vlaneseq
    %v1381 = vshrl.u32 %v1380, 7
    %v1382 = vsub.s32 %v879, %v1381
    %v1383 = vrot.slane %v756, %v1382
    %v1384 = vsel %vm884, %v1383, %v1379
    %v1385 = vlaneseq
    %v1386 = vshrl.u32 %v1385, 7
    %v1387 = vsub.s32 %v886, %v1386
    %v1388 = vrot.slane %v757, %v1387
    %v1389 = vsel %vm891, %v1388, %v1384
    %v1390 = vlaneseq
    %v1391 = vshrl.u32 %v1390, 7
    %v1392 = vsub.s32 %v893, %v1391
    %v1393 = vrot.slane %v758, %v1392
    %v1394 = vsel %vm898, %v1393, %v1389
    %v1395 = vlaneseq
    %v1396 = vshrl.u32 %v1395, 7
    %v1397 = vsub.s32 %v900, %v1396
    %v1398 = vrot.slane %v759, %v1397
    %v1399 = vsel %vm905, %v1398, %v1394
    %v1400 = vlaneseq
    %v1401 = vshrl.u32 %v1400, 7
    %v1402 = vsub.s32 %v907, %v1401
    %v1403 = vrot.slane %v760, %v1402
    %v1404 = vsel %vm912, %v1403, %v1399
    %v1405 = vlaneseq
    %v1406 = vshrl.u32 %v1405, 7
    %v1407 = vsub.s32 %v914, %v1406
    %v1408 = vrot.slane %v761, %v1407
    %v1409 = vsel %vm919, %v1408, %v1404
    %s1410 = scalar_lea.vmem [#allocation3], 5
    %1411 = vst [vmem:[%s1410] ss:$8 sm:$0x1] %v1409
    %1412 = vst [vmem:[%s1410] ss:$8 sm:$0x0] %v1409
    %v1429 = vlaneseq
    %v1430 = vshrl.u32 %v1429, 7
    %v1431 = vsub.s32 %v811, %v1430
    %v1432 = vrot.slane %v762, %v1431
    %v1433 = vlaneseq
    %v1434 = vshrl.u32 %v1433, 7
    %v1435 = vsub.s32 %v816, %v1434
    %v1436 = vrot.slane %v763, %v1435
    %v1437 = vsel %vm821, %v1436, %v1432
    %v1438 = vlaneseq
    %v1439 = vshrl.u32 %v1438, 7
    %v1440 = vsub.s32 %v823, %v1439
    %v1441 = vrot.slane %v764, %v1440
    %v1442 = vsel %vm828, %v1441, %v1437
    %v1443 = vlaneseq
    %v1444 = vshrl.u32 %v1443, 7
    %v1445 = vsub.s32 %v830, %v1444
    %v1446 = vrot.slane %v765, %v1445
    %v1447 = vsel %vm835, %v1446, %v1442
    %v1448 = vlaneseq
    %v1449 = vshrl.u32 %v1448, 7
    %v1450 = vsub.s32 %v837, %v1449
    %v1451 = vrot.slane %v766, %v1450
    %v1452 = vsel %vm842, %v1451, %v1447
    %v1453 = vlaneseq
    %v1454 = vshrl.u32 %v1453, 7
    %v1455 = vsub.s32 %v844, %v1454
    %v1456 = vrot.slane %v767, %v1455
    %v1457 = vsel %vm849, %v1456, %v1452
    %v1458 = vlaneseq
    %v1459 = vshrl.u32 %v1458, 7
    %v1460 = vsub.s32 %v851, %v1459
    %v1461 = vrot.slane %v768, %v1460
    %v1462 = vsel %vm856, %v1461, %v1457
    %v1463 = vlaneseq
    %v1464 = vshrl.u32 %v1463, 7
    %v1465 = vsub.s32 %v858, %v1464
    %v1466 = vrot.slane %v769, %v1465
    %v1467 = vsel %vm863, %v1466, %v1462
    %v1468 = vlaneseq
    %v1469 = vshrl.u32 %v1468, 7
    %v1470 = vsub.s32 %v865, %v1469
    %v1471 = vrot.slane %v770, %v1470
    %v1472 = vsel %vm870, %v1471, %v1467
    %v1473 = vlaneseq
    %v1474 = vshrl.u32 %v1473, 7
    %v1475 = vsub.s32 %v872, %v1474
    %v1476 = vrot.slane %v771, %v1475
    %v1477 = vsel %vm877, %v1476, %v1472
    %v1478 = vlaneseq
    %v1479 = vshrl.u32 %v1478, 7
    %v1480 = vsub.s32 %v879, %v1479
    %v1481 = vrot.slane %v772, %v1480
    %v1482 = vsel %vm884, %v1481, %v1477
    %v1483 = vlaneseq
    %v1484 = vshrl.u32 %v1483, 7
    %v1485 = vsub.s32 %v886, %v1484
    %v1486 = vrot.slane %v773, %v1485
    %v1487 = vsel %vm891, %v1486, %v1482
    %v1488 = vlaneseq
    %v1489 = vshrl.u32 %v1488, 7
    %v1490 = vsub.s32 %v893, %v1489
    %v1491 = vrot.slane %v774, %v1490
    %v1492 = vsel %vm898, %v1491, %v1487
    %v1493 = vlaneseq
    %v1494 = vshrl.u32 %v1493, 7
    %v1495 = vsub.s32 %v900, %v1494
    %v1496 = vrot.slane %v775, %v1495
    %v1497 = vsel %vm905, %v1496, %v1492
    %v1498 = vlaneseq
    %v1499 = vshrl.u32 %v1498, 7
    %v1500 = vsub.s32 %v907, %v1499
    %v1501 = vrot.slane %v776, %v1500
    %v1502 = vsel %vm912, %v1501, %v1497
    %v1503 = vlaneseq
    %v1504 = vshrl.u32 %v1503, 7
    %v1505 = vsub.s32 %v914, %v1504
    %v1506 = vrot.slane %v777, %v1505
    %v1507 = vsel %vm919, %v1506, %v1502
    %s1508 = scalar_lea.vmem [#allocation3], 6
    %1509 = vst [vmem:[%s1508] ss:$8 sm:$0x1] %v1507
    %1510 = vst [vmem:[%s1508] ss:$8 sm:$0x0] %v1507
    %v1527 = vlaneseq
    %v1528 = vshrl.u32 %v1527, 7
    %v1529 = vsub.s32 %v811, %v1528
    %v1530 = vrot.slane %v778, %v1529
    %v1531 = vlaneseq
    %v1532 = vshrl.u32 %v1531, 7
    %v1533 = vsub.s32 %v816, %v1532
    %v1534 = vrot.slane %v779, %v1533
    %v1535 = vsel %vm821, %v1534, %v1530
    %v1536 = vlaneseq
    %v1537 = vshrl.u32 %v1536, 7
    %v1538 = vsub.s32 %v823, %v1537
    %v1539 = vrot.slane %v780, %v1538
    %v1540 = vsel %vm828, %v1539, %v1535
    %v1541 = vlaneseq
    %v1542 = vshrl.u32 %v1541, 7
    %v1543 = vsub.s32 %v830, %v1542
    %v1544 = vrot.slane %v781, %v1543
    %v1545 = vsel %vm835, %v1544, %v1540
    %v1546 = vlaneseq
    %v1547 = vshrl.u32 %v1546, 7
    %v1548 = vsub.s32 %v837, %v1547
    %v1549 = vrot.slane %v782, %v1548
    %v1550 = vsel %vm842, %v1549, %v1545
    %v1551 = vlaneseq
    %v1552 = vshrl.u32 %v1551, 7
    %v1553 = vsub.s32 %v844, %v1552
    %v1554 = vrot.slane %v783, %v1553
    %v1555 = vsel %vm849, %v1554, %v1550
    %v1556 = vlaneseq
    %v1557 = vshrl.u32 %v1556, 7
    %v1558 = vsub.s32 %v851, %v1557
    %v1559 = vrot.slane %v784, %v1558
    %v1560 = vsel %vm856, %v1559, %v1555
    %v1561 = vlaneseq
    %v1562 = vshrl.u32 %v1561, 7
    %v1563 = vsub.s32 %v858, %v1562
    %v1564 = vrot.slane %v785, %v1563
    %v1565 = vsel %vm863, %v1564, %v1560
    %v1566 = vlaneseq
    %v1567 = vshrl.u32 %v1566, 7
    %v1568 = vsub.s32 %v865, %v1567
    %v1569 = vrot.slane %v786, %v1568
    %v1570 = vsel %vm870, %v1569, %v1565
    %v1571 = vlaneseq
    %v1572 = vshrl.u32 %v1571, 7
    %v1573 = vsub.s32 %v872, %v1572
    %v1574 = vrot.slane %v787, %v1573
    %v1575 = vsel %vm877, %v1574, %v1570
    %v1576 = vlaneseq
    %v1577 = vshrl.u32 %v1576, 7
    %v1578 = vsub.s32 %v879, %v1577
    %v1579 = vrot.slane %v788, %v1578
    %v1580 = vsel %vm884, %v1579, %v1575
    %v1581 = vlaneseq
    %v1582 = vshrl.u32 %v1581, 7
    %v1583 = vsub.s32 %v886, %v1582
    %v1584 = vrot.slane %v789, %v1583
    %v1585 = vsel %vm891, %v1584, %v1580
    %v1586 = vlaneseq
    %v1587 = vshrl.u32 %v1586, 7
    %v1588 = vsub.s32 %v893, %v1587
    %v1589 = vrot.slane %v790, %v1588
    %v1590 = vsel %vm898, %v1589, %v1585
    %v1591 = vlaneseq
    %v1592 = vshrl.u32 %v1591, 7
    %v1593 = vsub.s32 %v900, %v1592
    %v1594 = vrot.slane %v791, %v1593
    %v1595 = vsel %vm905, %v1594, %v1590
    %v1596 = vlaneseq
    %v1597 = vshrl.u32 %v1596, 7
    %v1598 = vsub.s32 %v907, %v1597
    %v1599 = vrot.slane %v792, %v1598
    %v1600 = vsel %vm912, %v1599, %v1595
    %v1601 = vlaneseq
    %v1602 = vshrl.u32 %v1601, 7
    %v1603 = vsub.s32 %v914, %v1602
    %v1604 = vrot.slane %v793, %v1603
    %v1605 = vsel %vm919, %v1604, %v1600
    %s1606 = scalar_lea.vmem [#allocation3], 7
    %1607 = vst [vmem:[%s1606] ss:$8 sm:$0x1] %v1605
    %1608 = vst [vmem:[%s1606] ss:$8 sm:$0x0] %v1605
    // Predicated region
    $region14: #{tpu_custom_call.1} parent=1 // pred_check
      _
    $region15: #{tpu_custom_call.1} parent=1 // pred_check_branch
      %1610 = sbr.rel (0) target = $region17
    $region16: #{tpu_custom_call.1} parent=1 // pred_region
      %s1612 = ssub.s32 128, 128
      %1613 = vsyncadd [#allocation4], %s1612
      %s1615 = sshll.u32 [#allocation3], 4
      %s1616 = int_to_ptr.vmem [resolvable:$true] %s1615
      %1618 = dma.vmem_to_hbm [thread:$0]  %s1616, 128, %s3, [#allocation4]
    $region17: #{tpu_custom_call.1} parent=1 // pred_fallthru
      _
    // Predicated region
    $region18: #{tpu_custom_call.1} parent=1 // pred_check
      _
    $region19: #{tpu_custom_call.1} parent=1 // pred_check_branch
      %1620 = sbr.rel (0) target = $region21
    $region20: #{tpu_custom_call.1} parent=1 // pred_region
      %1621 = dma.done [#allocation4], 128
    $region21: #{tpu_custom_call.1} parent=1 // pred_fallthru
      _
    %1622 = vsyncpa [#allocation4], 1

</llo_original>
